<compile_context>
chip_gen: v6e
topology: v6e:2x2x1
jax: 0.10.0
libtpu: 0.0.40
codegen_flags: <defaults>
</compile_context>

<pallas_src>
import jax
import jax.numpy as jnp
from jax.experimental import pallas as pl
from jax.experimental.pallas import tpu as pltpu

_HIGHEST = jax.lax.Precision.HIGHEST


def _round_up(x, m):
    return ((x + m - 1) // m) * m


def _make_encoder_kernel(num_convs, n_points, tile_n, eps):
    """Kernel factory (closure over static layer count / true N / tile / eps)."""

    def kernel(x_ref, *refs):
        # refs = [w1, b1, ..., wL, bL, fc_w, fc_b, gamma, beta, o_ref, max_sc]
        conv = refs[: 2 * num_convs]
        fc_w_ref, fc_b_ref, g_ref, beta_ref = refs[2 * num_convs: 2 * num_convs + 4]
        o_ref = refs[2 * num_convs + 4]
        max_sc = refs[2 * num_convs + 5]

        n = pl.program_id(1)

        @pl.when(n == 0)
        def _init():
            max_sc[...] = jnp.full(max_sc.shape, -jnp.inf, max_sc.dtype)

        x = x_ref[...]                          # (F, TN): features on sublanes, points on lanes
        f_dim, tn = x.shape
        w1 = conv[0][...]                       # (depth, F)
        depth = w1.shape[0]

        # conv1: tiny K=F contraction as unrolled VPU outer-product accumulate
        # (exact f32, keeps the MXU for the square layers).
        if f_dim <= 8:
            h = w1[:, 0:1] * x[0:1, :]
            for f in range(1, f_dim):
                h = h + w1[:, f:f + 1] * x[f:f + 1, :]
        else:
            h = jnp.dot(w1, x, preferred_element_type=jnp.float32)
        h = h + conv[1][...]                    # bias (depth, 1) broadcast over lanes

        # hidden 1x1 convs on the MXU: (depth,depth) @ (depth,TN), lane-dense,
        # default precision (single bf16 pass; HIGHEST dropped per perf review).
        for i in range(1, num_convs):
            h = jnp.maximum(h, 0.0)
            h = jnp.dot(conv[2 * i][...], h,
                        preferred_element_type=jnp.float32) + conv[2 * i + 1][...]

        # Mask point-padding lanes (ragged tail) so they never win the max.
        if n_points % tile_n != 0:
            col = jax.lax.broadcasted_iota(jnp.int32, (depth, tn), 1)
            h = jnp.where(n * tile_n + col < n_points, h, -jnp.inf)

        # Running max-pool over points: lane reduce -> (depth, 1).
        max_sc[...] = jnp.maximum(max_sc[...], jnp.max(h, axis=-1, keepdims=True))

        @pl.when(n == pl.num_programs(1) - 1)
        def _finalize():
            pooled = max_sc[...]                                     # (depth, 1)
            # FC: y[e] = sum_d fc_w[d, e] * pooled[d]  -> row (1, depth)
            # (VPU multiply + sublane reduce; exact f32, no matvec/transpose).
            y = jnp.sum(fc_w_ref[...] * pooled, axis=0, keepdims=True) + fc_b_ref[...]
            mu = jnp.mean(y, axis=-1, keepdims=True)
            var = jnp.mean(jnp.square(y - mu), axis=-1, keepdims=True)
            yhat = (y - mu) * jax.lax.rsqrt(var + eps)
            o_ref[...] = jnp.tanh(yhat * g_ref[...] + beta_ref[...]).astype(o_ref.dtype)

    return kernel


def pointcloud_encoder_forward(x, params, *, tile_n=512, eps=1e-5):
    """Single fused pallas_call: per-point MLP + max-pool + FC/LN/tanh."""
    x = x.astype(jnp.float32)
    B, N, F = x.shape
    conv_w, conv_b = params["conv_w"], params["conv_b"]
    fc_w, fc_b = params["fc_w"], params["fc_b"]
    gamma, beta = params["ln_gamma"], params["ln_beta"]
    depth = fc_w.shape[-1]
    num_convs = len(conv_w)

    # Lane-dense layout: points ride the lane axis.
    x_t = jnp.transpose(x, (0, 2, 1))                        # (B, F, N)

    TN = min(_round_up(tile_n, 128), _round_up(N, 128))
    n_arr = N
    if N < TN:
        # Tiny clouds only: pad once so the single point tile is in-bounds.
        # (Padded lanes are masked to -inf in-kernel, so zeros are safe.)
        x_t = jnp.pad(x_t, ((0, 0), (0, 0), (0, TN - N)))
        n_arr = TN
    grid = (B, pl.cdiv(n_arr, TN))

    in_specs = [pl.BlockSpec((None, F, TN), lambda b, n: (b, 0, n))]
    flat_params = []
    for w, bb in zip(conv_w, conv_b):
        in_specs += [pl.BlockSpec(w.shape, lambda b, n: (0, 0)),
                     pl.BlockSpec(bb.shape, lambda b, n: (0, 0))]
        flat_params += [w, bb]
    for p in (fc_w, fc_b, gamma, beta):
        in_specs.append(pl.BlockSpec(p.shape, lambda b, n: (0, 0)))
        flat_params.append(p)

    out_specs = pl.BlockSpec((None, 1, depth), lambda b, n: (b, 0, 0))

    flops = (2 * B * N * (F * depth + (num_convs - 1) * depth * depth)
             + 2 * B * depth * depth)
    bytes_accessed = (x.size + sum(int(p.size) for p in flat_params)
                      + B * depth) * 4

    out = pl.pallas_call(
        _make_encoder_kernel(num_convs, N, TN, eps),
        out_shape=jax.ShapeDtypeStruct((B, 1, depth), jnp.float32),
        grid=grid,
        in_specs=in_specs,
        out_specs=out_specs,
        scratch_shapes=[pltpu.VMEM((depth, 1), jnp.float32)],
        compiler_params=pltpu.CompilerParams(
            dimension_semantics=("parallel", "arbitrary")),
        cost_estimate=pl.CostEstimate(
            flops=int(flops),
            transcendentals=int(B * (depth + 1)),
            bytes_accessed=int(bytes_accessed)),
    )(x_t, *flat_params)
    return out[:, 0, :]


def init_pointcloud_encoder_params(key, in_features, depth, layers):
    """Init mimicking torch Conv1d/Linear uniform +-1/sqrt(fan_in).
    Conv weights stored (out, in) so the kernel computes W @ h directly;
    FC weight stored (in, out); biases/LN params shaped for their in-kernel use."""
    keys = jax.random.split(key, 2 * (layers + 1) + 2)

    def uniform(k, shape, fan_in):
        bound = 1.0 / jnp.sqrt(jnp.float32(fan_in))
        return jax.random.uniform(k, shape, jnp.float32, -bound, bound)

    conv_w, conv_b = [], []
    fan_in = in_features
    for i in range(layers):
        conv_w.append(uniform(keys[2 * i], (depth, fan_in), fan_in))   # (out, in)
        conv_b.append(uniform(keys[2 * i + 1], (depth, 1), fan_in))
        fan_in = depth
    fc_w = uniform(keys[2 * layers], (depth, depth), depth)            # (in, out)
    fc_b = uniform(keys[2 * layers + 1], (1, depth), depth)
    ln_gamma = 1.0 + 0.1 * jax.random.normal(keys[-2], (1, depth), jnp.float32)
    ln_beta = 0.1 * jax.random.normal(keys[-1], (1, depth), jnp.float32)
    return dict(conv_w=tuple(conv_w), conv_b=tuple(conv_b),
                fc_w=fc_w, fc_b=fc_b, ln_gamma=ln_gamma, ln_beta=ln_beta)


def pointcloud_encoder_reference(x, params, eps=1e-5):
    """Pure-JAX fp32 (HIGHEST) reference for correctness check."""
    conv_w, conv_b = params["conv_w"], params["conv_b"]
    h = jnp.einsum("bnf,df->bnd", x, conv_w[0], precision=_HIGHEST) + conv_b[0][:, 0]
    for w, b in zip(conv_w[1:], conv_b[1:]):
        h = jnp.einsum("bnd,ed->bne", jnp.maximum(h, 0.0), w,
                       precision=_HIGHEST) + b[:, 0]
    pooled = jnp.max(h, axis=1)
    y = jnp.dot(pooled, params["fc_w"], precision=_HIGHEST) + params["fc_b"]
    mu = jnp.mean(y, axis=-1, keepdims=True)
    var = jnp.mean(jnp.square(y - mu), axis=-1, keepdims=True)
    y = (y - mu) / jnp.sqrt(var + eps)
    return jnp.tanh(y * params["ln_gamma"] + params["ln_beta"])


if __name__ == "__main__":
    # Small shapes consistent with the module: a tiny point cloud.
    batch, num_points, in_features, depth, layers = 2, 64, 3, 32, 3

    key = jax.random.PRNGKey(0)
    k_x, k_params = jax.random.split(key)

    x = jax.random.normal(k_x, (batch, num_points, in_features), jnp.float32)
    params = init_pointcloud_encoder_params(k_params, in_features, depth, layers)

    out = jax.jit(pointcloud_encoder_forward)(x, params)
    out = jax.block_until_ready(out)

    ref = pointcloud_encoder_reference(x, params)
    assert out.shape == (batch, depth), out.shape
    # Hidden-layer dots now use default (single-pass bf16) MXU precision, so the
    # parity tolerance vs the fp32-HIGHEST reference is loosened accordingly.
    max_err = float(jnp.max(jnp.abs(out - ref)))
    assert max_err < 5e-2, max_err

    print("KERNEL_OK")
</pallas_src>

<mosaic_0001>
module attributes {stable_mosaic.version = 11 : i64} {
  func.func @kernel(%arg0: i32, %arg1: i32, %arg2: memref<1x3x128xf32, #tpu.memory_space<vmem>>, %arg3: memref<32x3xf32, #tpu.memory_space<vmem>>, %arg4: memref<32x1xf32, #tpu.memory_space<vmem>>, %arg5: memref<32x32xf32, #tpu.memory_space<vmem>>, %arg6: memref<32x1xf32, #tpu.memory_space<vmem>>, %arg7: memref<32x32xf32, #tpu.memory_space<vmem>>, %arg8: memref<32x1xf32, #tpu.memory_space<vmem>>, %arg9: memref<32x32xf32, #tpu.memory_space<vmem>>, %arg10: memref<1x32xf32, #tpu.memory_space<vmem>>, %arg11: memref<1x32xf32, #tpu.memory_space<vmem>>, %arg12: memref<1x32xf32, #tpu.memory_space<vmem>>, %arg13: memref<1x1x32xf32, #tpu.memory_space<vmem>>, %arg14: memref<32x1xf32, #tpu.memory_space<vmem>>) attributes {dimension_semantics = [#tpu.dimension_semantics<parallel>, #tpu.dimension_semantics<arbitrary>], iteration_bounds = array<i64: 2, 1>, scalar_prefetch = 0 : i64, scratch_operands = 1 : i64, tpu.core_type = #tpu.core_type<tc>, window_params = [{transform_indices = @transform_0, window_bounds = array<i64: 1, 3, 128>}, {pipeline_mode = #tpu.pipeline_mode<synchronous>, transform_indices = @transform_1, window_bounds = array<i64: 32, 3>}, {pipeline_mode = #tpu.pipeline_mode<synchronous>, transform_indices = @transform_2, window_bounds = array<i64: 32, 1>}, {pipeline_mode = #tpu.pipeline_mode<synchronous>, transform_indices = @transform_3, window_bounds = array<i64: 32, 32>}, {pipeline_mode = #tpu.pipeline_mode<synchronous>, transform_indices = @transform_4, window_bounds = array<i64: 32, 1>}, {pipeline_mode = #tpu.pipeline_mode<synchronous>, transform_indices = @transform_5, window_bounds = array<i64: 32, 32>}, {pipeline_mode = #tpu.pipeline_mode<synchronous>, transform_indices = @transform_6, window_bounds = array<i64: 32, 1>}, {pipeline_mode = #tpu.pipeline_mode<synchronous>, transform_indices = @transform_7, window_bounds = array<i64: 32, 32>}, {pipeline_mode = #tpu.pipeline_mode<synchronous>, transform_indices = @transform_8, window_bounds = array<i64: 1, 32>}, {pipeline_mode = #tpu.pipeline_mode<synchronous>, transform_indices = @transform_9, window_bounds = array<i64: 1, 32>}, {pipeline_mode = #tpu.pipeline_mode<synchronous>, transform_indices = @transform_10, window_bounds = array<i64: 1, 32>}, {transform_indices = @transform_11, window_bounds = array<i64: 1, 1, 32>}]} {
    %c0_i32 = arith.constant 0 : i32
    %0 = arith.cmpi eq, %arg1, %c0_i32 : i32
    %1 = arith.extui %0 : i1 to i32
    %c0_i32_0 = arith.constant 0 : i32
    %2 = arith.cmpi ne, %1, %c0_i32_0 : i32
    scf.if %2 {
      %cst_26 = arith.constant 0xFF800000 : f32
      %56 = vector.broadcast %cst_26 : f32 to vector<32x1xf32>
      %c0_27 = arith.constant 0 : index
      %c0_28 = arith.constant 0 : index
      %57 = vector.load %arg14[%c0_27, %c0_28] : memref<32x1xf32, #tpu.memory_space<vmem>>, vector<32x1xf32>
      tpu.vector_store %arg14[%c0_27, %c0_28], %56 {strides = array<i32>} : memref<32x1xf32, #tpu.memory_space<vmem>>, vector<32x1xf32>,
    } else {
    }
    %c0 = arith.constant 0 : index
    %c0_1 = arith.constant 0 : index
    %c0_2 = arith.constant 0 : index
    %3 = vector.load %arg2[%c0, %c0_1, %c0_2] : memref<1x3x128xf32, #tpu.memory_space<vmem>>, vector<1x3x128xf32>
    %4 = vector.shape_cast %3 : vector<1x3x128xf32> to vector<3x128xf32>
    %c0_3 = arith.constant 0 : index
    %c0_4 = arith.constant 0 : index
    %5 = vector.load %arg3[%c0_3, %c0_4] : memref<32x3xf32, #tpu.memory_space<vmem>>, vector<32x3xf32>
    %6 = vector.extract_strided_slice %5 {offsets = [0, 0], sizes = [32, 1], strides = [1, 1]} : vector<32x3xf32> to vector<32x1xf32>
    %7 = vector.extract_strided_slice %4 {offsets = [0, 0], sizes = [1, 128], strides = [1, 1]} : vector<3x128xf32> to vector<1x128xf32>
    %8 = vector.broadcast %6 : vector<32x1xf32> to vector<32x128xf32>
    %9 = vector.broadcast %7 : vector<1x128xf32> to vector<32x128xf32>
    %10 = arith.mulf %8, %9 : vector<32x128xf32>
    %11 = vector.extract_strided_slice %5 {offsets = [0, 1], sizes = [32, 1], strides = [1, 1]} : vector<32x3xf32> to vector<32x1xf32>
    %12 = vector.extract_strided_slice %4 {offsets = [1, 0], sizes = [1, 128], strides = [1, 1]} : vector<3x128xf32> to vector<1x128xf32>
    %13 = vector.broadcast %11 : vector<32x1xf32> to vector<32x128xf32>
    %14 = vector.broadcast %12 : vector<1x128xf32> to vector<32x128xf32>
    %15 = arith.mulf %13, %14 : vector<32x128xf32>
    %16 = arith.addf %10, %15 : vector<32x128xf32>
    %17 = vector.extract_strided_slice %5 {offsets = [0, 2], sizes = [32, 1], strides = [1, 1]} : vector<32x3xf32> to vector<32x1xf32>
    %18 = vector.extract_strided_slice %4 {offsets = [2, 0], sizes = [1, 128], strides = [1, 1]} : vector<3x128xf32> to vector<1x128xf32>
    %19 = vector.broadcast %17 : vector<32x1xf32> to vector<32x128xf32>
    %20 = vector.broadcast %18 : vector<1x128xf32> to vector<32x128xf32>
    %21 = arith.mulf %19, %20 : vector<32x128xf32>
    %22 = arith.addf %16, %21 : vector<32x128xf32>
    %c0_5 = arith.constant 0 : index
    %c0_6 = arith.constant 0 : index
    %23 = vector.load %arg4[%c0_5, %c0_6] : memref<32x1xf32, #tpu.memory_space<vmem>>, vector<32x1xf32>
    %24 = vector.broadcast %23 : vector<32x1xf32> to vector<32x128xf32>
    %25 = arith.addf %22, %24 : vector<32x128xf32>
    %cst = arith.constant 0.000000e+00 : f32
    %26 = vector.broadcast %cst : f32 to vector<32x128xf32>
    %27 = arith.maximumf %25, %26 : vector<32x128xf32>
    %c0_7 = arith.constant 0 : index
    %c0_8 = arith.constant 0 : index
    %28 = vector.load %arg5[%c0_7, %c0_8] : memref<32x32xf32, #tpu.memory_space<vmem>>, vector<32x32xf32>
    %cst_9 = arith.constant dense<0.000000e+00> : vector<32x128xf32>
    %29 = tpu.matmul %28, %27, %cst_9 {dimension_numbers = #tpu.dot_dimension_numbers<[1], [0], [0], [1], [0, 0, 1, 1], [], []>} : vector<32x32xf32>, vector<32x128xf32>, vector<32x128xf32> -> vector<32x128xf32>
    %c0_10 = arith.constant 0 : index
    %c0_11 = arith.constant 0 : index
    %30 = vector.load %arg6[%c0_10, %c0_11] : memref<32x1xf32, #tpu.memory_space<vmem>>, vector<32x1xf32>
    %31 = vector.broadcast %30 : vector<32x1xf32> to vector<32x128xf32>
    %32 = arith.addf %29, %31 : vector<32x128xf32>
    %cst_12 = arith.constant 0.000000e+00 : f32
    %33 = vector.broadcast %cst_12 : f32 to vector<32x128xf32>
    %34 = arith.maximumf %32, %33 : vector<32x128xf32>
    %c0_13 = arith.constant 0 : index
    %c0_14 = arith.constant 0 : index
    %35 = vector.load %arg7[%c0_13, %c0_14] : memref<32x32xf32, #tpu.memory_space<vmem>>, vector<32x32xf32>
    %cst_15 = arith.constant dense<0.000000e+00> : vector<32x128xf32>
    %36 = tpu.matmul %35, %34, %cst_15 {dimension_numbers = #tpu.dot_dimension_numbers<[1], [0], [0], [1], [0, 0, 1, 1], [], []>} : vector<32x32xf32>, vector<32x128xf32>, vector<32x128xf32> -> vector<32x128xf32>
    %c0_16 = arith.constant 0 : index
    %c0_17 = arith.constant 0 : index
    %37 = vector.load %arg8[%c0_16, %c0_17] : memref<32x1xf32, #tpu.memory_space<vmem>>, vector<32x1xf32>
    %38 = vector.broadcast %37 : vector<32x1xf32> to vector<32x128xf32>
    %39 = arith.addf %36, %38 : vector<32x128xf32>
    %40 = tpu.iota {dimensions = array<i32: 1>} : vector<32x128xi32>
    %c128_i32 = arith.constant 128 : i32
    %41 = arith.muli %arg1, %c128_i32 : i32
    %42 = vector.broadcast %41 : i32 to vector<32x128xi32>
    %43 = arith.addi %42, %40 : vector<32x128xi32>
    %c64_i32 = arith.constant 64 : i32
    %44 = vector.broadcast %c64_i32 : i32 to vector<32x128xi32>
    %45 = arith.cmpi slt, %43, %44 : vector<32x128xi32>
    %cst_18 = arith.constant 0xFF800000 : f32
    %46 = vector.broadcast %cst_18 : f32 to vector<32x128xf32>
    %47 = arith.select %45, %39, %46 : vector<32x128xi1>, vector<32x128xf32>
    %c0_19 = arith.constant 0 : index
    %c0_20 = arith.constant 0 : index
    %48 = vector.load %arg14[%c0_19, %c0_20] : memref<32x1xf32, #tpu.memory_space<vmem>>, vector<32x1xf32>
    %cst_21 = arith.constant dense<0xFF800000> : vector<32xf32>
    %49 = vector.multi_reduction <maximumf>, %47, %cst_21 [1] : vector<32x128xf32> to vector<32xf32>
    %50 = vector.shape_cast %49 : vector<32xf32> to vector<32x1xf32>
    %51 = arith.maximumf %48, %50 : vector<32x1xf32>
    %c0_22 = arith.constant 0 : index
    %c0_23 = arith.constant 0 : index
    %52 = vector.load %arg14[%c0_22, %c0_23] : memref<32x1xf32, #tpu.memory_space<vmem>>, vector<32x1xf32>
    tpu.vector_store %arg14[%c0_22, %c0_23], %51 {strides = array<i32>} : memref<32x1xf32, #tpu.memory_space<vmem>>, vector<32x1xf32>,
    %c0_i32_24 = arith.constant 0 : i32
    %53 = arith.cmpi eq, %arg1, %c0_i32_24 : i32
    %54 = arith.extui %53 : i1 to i32
    %c0_i32_25 = arith.constant 0 : i32
    %55 = arith.cmpi ne, %54, %c0_i32_25 : i32
    scf.if %55 {
      %c0_26 = arith.constant 0 : index
      %c0_27 = arith.constant 0 : index
      %56 = vector.load %arg14[%c0_26, %c0_27] : memref<32x1xf32, #tpu.memory_space<vmem>>, vector<32x1xf32>
      %c0_28 = arith.constant 0 : index
      %c0_29 = arith.constant 0 : index
      %57 = vector.load %arg9[%c0_28, %c0_29] : memref<32x32xf32, #tpu.memory_space<vmem>>, vector<32x32xf32>
      %58 = vector.broadcast %56 : vector<32x1xf32> to vector<32x32xf32>
      %59 = arith.mulf %57, %58 : vector<32x32xf32>
      %cst_30 = arith.constant dense<0.000000e+00> : vector<32xf32>
      %60 = vector.multi_reduction <add>, %59, %cst_30 [0] : vector<32x32xf32> to vector<32xf32>
      %61 = vector.shape_cast %60 : vector<32xf32> to vector<1x32xf32>
      %c0_31 = arith.constant 0 : index
      %c0_32 = arith.constant 0 : index
      %62 = vector.load %arg10[%c0_31, %c0_32] : memref<1x32xf32, #tpu.memory_space<vmem>>, vector<1x32xf32>
      %63 = arith.addf %61, %62 : vector<1x32xf32>
      %cst_33 = arith.constant dense<0.000000e+00> : vector<1xf32>
      %64 = vector.multi_reduction <add>, %63, %cst_33 [1] : vector<1x32xf32> to vector<1xf32>
      %65 = vector.shape_cast %64 : vector<1xf32> to vector<1x1xf32>
      %cst_34 = arith.constant 3.200000e+01 : f32
      %66 = vector.broadcast %cst_34 : f32 to vector<1x1xf32>
      %67 = arith.divf %65, %66 : vector<1x1xf32>
      %68 = vector.broadcast %67 : vector<1x1xf32> to vector<1x32xf32>
      %69 = arith.subf %63, %68 : vector<1x32xf32>
      %70 = arith.mulf %69, %69 : vector<1x32xf32>
      %cst_35 = arith.constant dense<0.000000e+00> : vector<1xf32>
      %71 = vector.multi_reduction <add>, %70, %cst_35 [1] : vector<1x32xf32> to vector<1xf32>
      %72 = vector.shape_cast %71 : vector<1xf32> to vector<1x1xf32>
      %cst_36 = arith.constant 3.200000e+01 : f32
      %73 = vector.broadcast %cst_36 : f32 to vector<1x1xf32>
      %74 = arith.divf %72, %73 : vector<1x1xf32>
      %75 = vector.broadcast %67 : vector<1x1xf32> to vector<1x32xf32>
      %76 = arith.subf %63, %75 : vector<1x32xf32>
      %cst_37 = arith.constant 9.99999974E-6 : f32
      %77 = vector.broadcast %cst_37 : f32 to vector<1x1xf32>
      %78 = arith.addf %74, %77 : vector<1x1xf32>
      %79 = math.rsqrt %78 : vector<1x1xf32>
      %80 = vector.broadcast %79 : vector<1x1xf32> to vector<1x32xf32>
      %81 = arith.mulf %76, %80 : vector<1x32xf32>
      %c0_38 = arith.constant 0 : index
      %c0_39 = arith.constant 0 : index
      %82 = vector.load %arg11[%c0_38, %c0_39] : memref<1x32xf32, #tpu.memory_space<vmem>>, vector<1x32xf32>
      %83 = arith.mulf %81, %82 : vector<1x32xf32>
      %c0_40 = arith.constant 0 : index
      %c0_41 = arith.constant 0 : index
      %84 = vector.load %arg12[%c0_40, %c0_41] : memref<1x32xf32, #tpu.memory_space<vmem>>, vector<1x32xf32>
      %85 = arith.addf %83, %84 : vector<1x32xf32>
      %86 = math.tanh %85 : vector<1x32xf32>
      %c0_42 = arith.constant 0 : index
      %c0_43 = arith.constant 0 : index
      %c0_44 = arith.constant 0 : index
      %87 = vector.load %arg13[%c0_42, %c0_43, %c0_44] : memref<1x1x32xf32, #tpu.memory_space<vmem>>, vector<1x1x32xf32>
      %88 = vector.shape_cast %87 : vector<1x1x32xf32> to vector<1x32xf32>
      %89 = vector.shape_cast %86 : vector<1x32xf32> to vector<1x1x32xf32>
      tpu.vector_store %arg13[%c0_42, %c0_43, %c0_44], %89 {strides = array<i32>} : memref<1x1x32xf32, #tpu.memory_space<vmem>>, vector<1x1x32xf32>,
    } else {
    }
    return
  }
  func.func @transform_0(%arg0: i32, %arg1: i32) -> (i32, i32, i32) {
    %c0_i32 = arith.constant 0 : i32
    %c0_i32_0 = arith.constant 0 : i32
    return %arg0, %c0_i32, %arg1 : i32, i32, i32
  }
  func.func @transform_1(%arg0: i32, %arg1: i32) -> (i32, i32) {
    %c0_i32 = arith.constant 0 : i32
    %c0_i32_0 = arith.constant 0 : i32
    %c0_i32_1 = arith.constant 0 : i32
    return %c0_i32, %c0_i32_0 : i32, i32
  }
  func.func @transform_2(%arg0: i32, %arg1: i32) -> (i32, i32) {
    %c0_i32 = arith.constant 0 : i32
    %c0_i32_0 = arith.constant 0 : i32
    %c0_i32_1 = arith.constant 0 : i32
    return %c0_i32, %c0_i32_0 : i32, i32
  }
  func.func @transform_3(%arg0: i32, %arg1: i32) -> (i32, i32) {
    %c0_i32 = arith.constant 0 : i32
    %c0_i32_0 = arith.constant 0 : i32
    %c0_i32_1 = arith.constant 0 : i32
    return %c0_i32, %c0_i32_0 : i32, i32
  }
  func.func @transform_4(%arg0: i32, %arg1: i32) -> (i32, i32) {
    %c0_i32 = arith.constant 0 : i32
    %c0_i32_0 = arith.constant 0 : i32
    %c0_i32_1 = arith.constant 0 : i32
    return %c0_i32, %c0_i32_0 : i32, i32
  }
  func.func @transform_5(%arg0: i32, %arg1: i32) -> (i32, i32) {
    %c0_i32 = arith.constant 0 : i32
    %c0_i32_0 = arith.constant 0 : i32
    %c0_i32_1 = arith.constant 0 : i32
    return %c0_i32, %c0_i32_0 : i32, i32
  }
  func.func @transform_6(%arg0: i32, %arg1: i32) -> (i32, i32) {
    %c0_i32 = arith.constant 0 : i32
    %c0_i32_0 = arith.constant 0 : i32
    %c0_i32_1 = arith.constant 0 : i32
    return %c0_i32, %c0_i32_0 : i32, i32
  }
  func.func @transform_7(%arg0: i32, %arg1: i32) -> (i32, i32) {
    %c0_i32 = arith.constant 0 : i32
    %c0_i32_0 = arith.constant 0 : i32
    %c0_i32_1 = arith.constant 0 : i32
    return %c0_i32, %c0_i32_0 : i32, i32
  }
  func.func @transform_8(%arg0: i32, %arg1: i32) -> (i32, i32) {
    %c0_i32 = arith.constant 0 : i32
    %c0_i32_0 = arith.constant 0 : i32
    %c0_i32_1 = arith.constant 0 : i32
    return %c0_i32, %c0_i32_0 : i32, i32
  }
  func.func @transform_9(%arg0: i32, %arg1: i32) -> (i32, i32) {
    %c0_i32 = arith.constant 0 : i32
    %c0_i32_0 = arith.constant 0 : i32
    %c0_i32_1 = arith.constant 0 : i32
    return %c0_i32, %c0_i32_0 : i32, i32
  }
  func.func @transform_10(%arg0: i32, %arg1: i32) -> (i32, i32) {
    %c0_i32 = arith.constant 0 : i32
    %c0_i32_0 = arith.constant 0 : i32
    %c0_i32_1 = arith.constant 0 : i32
    return %c0_i32, %c0_i32_0 : i32, i32
  }
  func.func @transform_11(%arg0: i32, %arg1: i32) -> (i32, i32, i32) {
    %c0_i32 = arith.constant 0 : i32
    %c0_i32_0 = arith.constant 0 : i32
    %c0_i32_1 = arith.constant 0 : i32
    return %arg0, %c0_i32, %c0_i32_0 : i32, i32, i32
  }
}

</mosaic_0001>

<llo_original>
// kernel: pointcloud_encoder_forward.1
$region0: #{pointcloud_encoder_forward.1}
  #allocation0 [shape = 'u32[]', space=smem, size = 0x4, offset = 0x4, fixed_abs, tag = 'smem constant byte address 0x4 - core index']
  #allocation1 [shape = 'u32[144,128]{1,0:T(1,128)}', space=vmem, size = 0x12000, scoped, tag = 'internal scratch']
  #allocation2 [shape = 'f32[32,1]{1,0:T(8,128)}', space=vmem, size = 0x4000, scoped, tag = 'scratch operand']
  %s0 = inlined_call_operand.vmem [shape: f32[2,3,128], index: 0, kind: input, shape index: {}]
  %s1 = inlined_call_operand.vmem [shape: f32[32,3], index: 1, kind: input, shape index: {}]
  %s2 = inlined_call_operand.vmem [shape: f32[32,1], index: 2, kind: input, shape index: {}]
  %s3 = inlined_call_operand.vmem [shape: f32[32,32], index: 3, kind: input, shape index: {}]
  %s4 = inlined_call_operand.vmem [shape: f32[32,1], index: 4, kind: input, shape index: {}]
  %s5 = inlined_call_operand.vmem [shape: f32[32,32], index: 5, kind: input, shape index: {}]
  %s6 = inlined_call_operand.vmem [shape: f32[32,1], index: 6, kind: input, shape index: {}]
  %s7 = inlined_call_operand.vmem [shape: f32[32,32], index: 7, kind: input, shape index: {}]
  %s8 = inlined_call_operand.vmem [shape: f32[1,32], index: 8, kind: input, shape index: {}]
  %s9 = inlined_call_operand.vmem [shape: f32[1,32], index: 9, kind: input, shape index: {}]
  %s10 = inlined_call_operand.vmem [shape: f32[1,32], index: 10, kind: input, shape index: {}]
  %s11 = inlined_call_operand.hbm [shape: f32[2,1,32], index: 11, kind: output, shape index: {}]
  %s12 = sld [smem:[#allocation0]]
  $region85: #{pointcloud_encoder_forward.1} parent=0
    _
  %s14 = ssub.s32 1, %s12
  %s15 = scalar_select 0, %s14, %s12
  $region1: #{pointcloud_encoder_forward.1} parent=0
    #allocation3 [shape = 'u8[1024]{0}', space=vmem, size = 0x400, scoped, tag = 'output window, operand 0']
    #allocation4 [shape = 's32[2]{0}', space=sflag, size = 0x8, scoped, tag = 'scoped memory for pointcloud_encoder_forward.1']
    %16 = vsyncpa [#allocation4], 0
    %s17 = scalar_lea.sflag [#allocation4], 1
    %18 = vsyncpa %s17, 0
    loop: start=0, step=1, limit=4
    $region2: #{pointcloud_encoder_forward.1} parent=1 // loop_pre_header
      _
    $region3: #{pointcloud_encoder_forward.1} parent=1 // loop_header
      %s20 = sphi 0, %s24
      %p21 = scmp.ge.s32.totalorder %s20, 4
      %s27 = sphi 0, %s39
      %s28 = sphi 0, %s35
      %s29 = sphi 0, %s27
      %s30 = sphi 0, %s28
      %s31 = sphi 0, %s29
      %s32 = sphi 0, %s30
      %s44 = sphi 0, %s46
      %s47 = sphi 0, %s44
      %s48 = sphi 0, %s47
      %s64 = sphi 0, %s48
      %s68 = sphi 0, %s68
      %s70 = sphi 0, %s68
      %s71 = sphi 0, %s70
      %s85 = sphi 0, %s71
      %s89 = sphi 0, %s89
      %s91 = sphi 0, %s89
      %s92 = sphi 0, %s91
      %s106 = sphi 0, %s92
      %s110 = sphi 0, %s110
      %s112 = sphi 0, %s110
      %s113 = sphi 0, %s112
      %s127 = sphi 0, %s113
      %s131 = sphi 0, %s131
      %s133 = sphi 0, %s131
      %s134 = sphi 0, %s133
      %s148 = sphi 0, %s134
      %s152 = sphi 0, %s152
      %s154 = sphi 0, %s152
      %s155 = sphi 0, %s154
      %s169 = sphi 0, %s155
      %s173 = sphi 0, %s173
      %s175 = sphi 0, %s173
      %s176 = sphi 0, %s175
      %s190 = sphi 0, %s176
      %s194 = sphi 0, %s194
      %s196 = sphi 0, %s194
      %s197 = sphi 0, %s196
      %s211 = sphi 0, %s197
      %s215 = sphi 0, %s215
      %s217 = sphi 0, %s215
      %s218 = sphi 0, %s217
      %s232 = sphi 0, %s218
      %s236 = sphi 0, %s236
      %s238 = sphi 0, %s236
      %s239 = sphi 0, %s238
      %s253 = sphi 0, %s239
      %s257 = sphi 0, %s257
      %s259 = sphi 0, %s257
      %s260 = sphi 0, %s259
      %s274 = sphi 0, %s260
      %s280 = sphi 0, %s282
      %s283 = sphi 0, %s280
      %s284 = sphi 0, %s283
      %s300 = sphi 0, %s284
    $region4: #{pointcloud_encoder_forward.1} parent=1 // loop_header_branch
      %23 = sbr.rel (%p21) target = $region8
    $region5: #{pointcloud_encoder_forward.1} parent=1 // loop_body
      %s25 = ssub.s32 %s20, 1
      %s26 = ssub.s32 %s20, 2
      %s33 = sadd.s32 1, %s28
      %p34 = scmp.ge.s32.totalorder %s33, 1
      %s35 = scalar_select %p34, 0, %s33
      %s36 = sadd.s32 1, %s27
      %s37 = scalar_select %p34, %s36, %s27
      %p38 = scmp.ge.s32.totalorder %s37, 2
      %s39 = scalar_select %p38, 0, %s37
      %s40 = ssub.s32 %s27, %s39
      %s41 = ssub.s32 %s28, %s35
      %s42 = sor.u32 %s40, %s41
      %p43 = scmp.eq.s32.totalorder %s42, 0
      %s45 = sadd.s32 %s44, 1
      %s46 = scalar_select %p43, %s44, %s45
      %p49 = pneg %p43
      %p50 = scmp.eq.s32.totalorder %s20, 1
      %p51 = por %p49, %p50
      %p52 = scmp.ne.s32.totalorder %s44, %s47
      %p53 = scmp.eq.s32.totalorder %s20, 0
      %p54 = por %p52, %p53
      %p55 = scmp.ne.s32.totalorder %s44, %s47
      %p56 = scmp.eq.s32.totalorder %s25, 1
      %p57 = por %p55, %p56
      %p58 = scmp.ne.s32.totalorder %s47, %s48
      %p59 = scmp.eq.s32.totalorder %s25, 0
      %p60 = por %p58, %p59
      %p61 = scmp.ne.s32.totalorder %s47, %s48
      %p62 = scmp.eq.s32.totalorder %s26, 1
      %p63 = por %p61, %p62
      %p65 = scmp.ne.s32.totalorder %s48, %s64
      %p66 = scmp.eq.s32.totalorder %s26, 0
      %p67 = por %p65, %p66
      %s69 = sadd.s32 %s68, 1
      %p72 = scmp.eq.s32.totalorder %s20, 1
      %p73 = scmp.ne.s32.totalorder %s68, %s70
      %p74 = scmp.eq.s32.totalorder %s20, 0
      %p75 = por %p73, %p74
      %p76 = scmp.ne.s32.totalorder %s68, %s70
      %p77 = scmp.eq.s32.totalorder %s25, 1
      %p78 = por %p76, %p77
      %p79 = scmp.ne.s32.totalorder %s70, %s71
      %p80 = scmp.eq.s32.totalorder %s25, 0
      %p81 = por %p79, %p80
      %p82 = scmp.ne.s32.totalorder %s70, %s71
      %p83 = scmp.eq.s32.totalorder %s26, 1
      %p84 = por %p82, %p83
      %p86 = scmp.ne.s32.totalorder %s71, %s85
      %p87 = scmp.eq.s32.totalorder %s26, 0
      %p88 = por %p86, %p87
      %s90 = sadd.s32 %s89, 1
      %p93 = scmp.eq.s32.totalorder %s20, 1
      %p94 = scmp.ne.s32.totalorder %s89, %s91
      %p95 = scmp.eq.s32.totalorder %s20, 0
      %p96 = por %p94, %p95
      %p97 = scmp.ne.s32.totalorder %s89, %s91
      %p98 = scmp.eq.s32.totalorder %s25, 1
      %p99 = por %p97, %p98
      %p100 = scmp.ne.s32.totalorder %s91, %s92
      %p101 = scmp.eq.s32.totalorder %s25, 0
      %p102 = por %p100, %p101
      %p103 = scmp.ne.s32.totalorder %s91, %s92
      %p104 = scmp.eq.s32.totalorder %s26, 1
      %p105 = por %p103, %p104
      %p107 = scmp.ne.s32.totalorder %s92, %s106
      %p108 = scmp.eq.s32.totalorder %s26, 0
      %p109 = por %p107, %p108
      %s111 = sadd.s32 %s110, 1
      %p114 = scmp.eq.s32.totalorder %s20, 1
      %p115 = scmp.ne.s32.totalorder %s110, %s112
      %p116 = scmp.eq.s32.totalorder %s20, 0
      %p117 = por %p115, %p116
      %p118 = scmp.ne.s32.totalorder %s110, %s112
      %p119 = scmp.eq.s32.totalorder %s25, 1
      %p120 = por %p118, %p119
      %p121 = scmp.ne.s32.totalorder %s112, %s113
      %p122 = scmp.eq.s32.totalorder %s25, 0
      %p123 = por %p121, %p122
      %p124 = scmp.ne.s32.totalorder %s112, %s113
      %p125 = scmp.eq.s32.totalorder %s26, 1
      %p126 = por %p124, %p125
      %p128 = scmp.ne.s32.totalorder %s113, %s127
      %p129 = scmp.eq.s32.totalorder %s26, 0
      %p130 = por %p128, %p129
      %s132 = sadd.s32 %s131, 1
      %p135 = scmp.eq.s32.totalorder %s20, 1
      %p136 = scmp.ne.s32.totalorder %s131, %s133
      %p137 = scmp.eq.s32.totalorder %s20, 0
      %p138 = por %p136, %p137
      %p139 = scmp.ne.s32.totalorder %s131, %s133
      %p140 = scmp.eq.s32.totalorder %s25, 1
      %p141 = por %p139, %p140
      %p142 = scmp.ne.s32.totalorder %s133, %s134
      %p143 = scmp.eq.s32.totalorder %s25, 0
      %p144 = por %p142, %p143
      %p145 = scmp.ne.s32.totalorder %s133, %s134
      %p146 = scmp.eq.s32.totalorder %s26, 1
      %p147 = por %p145, %p146
      %p149 = scmp.ne.s32.totalorder %s134, %s148
      %p150 = scmp.eq.s32.totalorder %s26, 0
      %p151 = por %p149, %p150
      %s153 = sadd.s32 %s152, 1
      %p156 = scmp.eq.s32.totalorder %s20, 1
      %p157 = scmp.ne.s32.totalorder %s152, %s154
      %p158 = scmp.eq.s32.totalorder %s20, 0
      %p159 = por %p157, %p158
      %p160 = scmp.ne.s32.totalorder %s152, %s154
      %p161 = scmp.eq.s32.totalorder %s25, 1
      %p162 = por %p160, %p161
      %p163 = scmp.ne.s32.totalorder %s154, %s155
      %p164 = scmp.eq.s32.totalorder %s25, 0
      %p165 = por %p163, %p164
      %p166 = scmp.ne.s32.totalorder %s154, %s155
      %p167 = scmp.eq.s32.totalorder %s26, 1
      %p168 = por %p166, %p167
      %p170 = scmp.ne.s32.totalorder %s155, %s169
      %p171 = scmp.eq.s32.totalorder %s26, 0
      %p172 = por %p170, %p171
      %s174 = sadd.s32 %s173, 1
      %p177 = scmp.eq.s32.totalorder %s20, 1
      %p178 = scmp.ne.s32.totalorder %s173, %s175
      %p179 = scmp.eq.s32.totalorder %s20, 0
      %p180 = por %p178, %p179
      %p181 = scmp.ne.s32.totalorder %s173, %s175
      %p182 = scmp.eq.s32.totalorder %s25, 1
      %p183 = por %p181, %p182
      %p184 = scmp.ne.s32.totalorder %s175, %s176
      %p185 = scmp.eq.s32.totalorder %s25, 0
      %p186 = por %p184, %p185
      %p187 = scmp.ne.s32.totalorder %s175, %s176
      %p188 = scmp.eq.s32.totalorder %s26, 1
      %p189 = por %p187, %p188
      %p191 = scmp.ne.s32.totalorder %s176, %s190
      %p192 = scmp.eq.s32.totalorder %s26, 0
      %p193 = por %p191, %p192
      %s195 = sadd.s32 %s194, 1
      %p198 = scmp.eq.s32.totalorder %s20, 1
      %p199 = scmp.ne.s32.totalorder %s194, %s196
      %p200 = scmp.eq.s32.totalorder %s20, 0
      %p201 = por %p199, %p200
      %p202 = scmp.ne.s32.totalorder %s194, %s196
      %p203 = scmp.eq.s32.totalorder %s25, 1
      %p204 = por %p202, %p203
      %p205 = scmp.ne.s32.totalorder %s196, %s197
      %p206 = scmp.eq.s32.totalorder %s25, 0
      %p207 = por %p205, %p206
      %p208 = scmp.ne.s32.totalorder %s196, %s197
      %p209 = scmp.eq.s32.totalorder %s26, 1
      %p210 = por %p208, %p209
      %p212 = scmp.ne.s32.totalorder %s197, %s211
      %p213 = scmp.eq.s32.totalorder %s26, 0
      %p214 = por %p212, %p213
      %s216 = sadd.s32 %s215, 1
      %p219 = scmp.eq.s32.totalorder %s20, 1
      %p220 = scmp.ne.s32.totalorder %s215, %s217
      %p221 = scmp.eq.s32.totalorder %s20, 0
      %p222 = por %p220, %p221
      %p223 = scmp.ne.s32.totalorder %s215, %s217
      %p224 = scmp.eq.s32.totalorder %s25, 1
      %p225 = por %p223, %p224
      %p226 = scmp.ne.s32.totalorder %s217, %s218
      %p227 = scmp.eq.s32.totalorder %s25, 0
      %p228 = por %p226, %p227
      %p229 = scmp.ne.s32.totalorder %s217, %s218
      %p230 = scmp.eq.s32.totalorder %s26, 1
      %p231 = por %p229, %p230
      %p233 = scmp.ne.s32.totalorder %s218, %s232
      %p234 = scmp.eq.s32.totalorder %s26, 0
      %p235 = por %p233, %p234
      %s237 = sadd.s32 %s236, 1
      %p240 = scmp.eq.s32.totalorder %s20, 1
      %p241 = scmp.ne.s32.totalorder %s236, %s238
      %p242 = scmp.eq.s32.totalorder %s20, 0
      %p243 = por %p241, %p242
      %p244 = scmp.ne.s32.totalorder %s236, %s238
      %p245 = scmp.eq.s32.totalorder %s25, 1
      %p246 = por %p244, %p245
      %p247 = scmp.ne.s32.totalorder %s238, %s239
      %p248 = scmp.eq.s32.totalorder %s25, 0
      %p249 = por %p247, %p248
      %p250 = scmp.ne.s32.totalorder %s238, %s239
      %p251 = scmp.eq.s32.totalorder %s26, 1
      %p252 = por %p250, %p251
      %p254 = scmp.ne.s32.totalorder %s239, %s253
      %p255 = scmp.eq.s32.totalorder %s26, 0
      %p256 = por %p254, %p255
      %s258 = sadd.s32 %s257, 1
      %p261 = scmp.eq.s32.totalorder %s20, 1
      %p262 = scmp.ne.s32.totalorder %s257, %s259
      %p263 = scmp.eq.s32.totalorder %s20, 0
      %p264 = por %p262, %p263
      %p265 = scmp.ne.s32.totalorder %s257, %s259
      %p266 = scmp.eq.s32.totalorder %s25, 1
      %p267 = por %p265, %p266
      %p268 = scmp.ne.s32.totalorder %s259, %s260
      %p269 = scmp.eq.s32.totalorder %s25, 0
      %p270 = por %p268, %p269
      %p271 = scmp.ne.s32.totalorder %s259, %s260
      %p272 = scmp.eq.s32.totalorder %s26, 1
      %p273 = por %p271, %p272
      %p275 = scmp.ne.s32.totalorder %s260, %s274
      %p276 = scmp.eq.s32.totalorder %s26, 0
      %p277 = por %p275, %p276
      %s278 = ssub.s32 %s27, %s39
      %p279 = scmp.eq.s32.totalorder %s278, 0
      %s281 = sadd.s32 %s280, 1
      %s282 = scalar_select %p279, %s280, %s281
      %p285 = pneg %p279
      %p286 = scmp.eq.s32.totalorder %s20, 1
      %p287 = por %p285, %p286
      %p288 = scmp.ne.s32.totalorder %s280, %s283
      %p289 = scmp.eq.s32.totalorder %s20, 0
      %p290 = por %p288, %p289
      %p291 = scmp.ne.s32.totalorder %s280, %s283
      %p292 = scmp.eq.s32.totalorder %s25, 1
      %p293 = por %p291, %p292
      %p294 = scmp.ne.s32.totalorder %s283, %s284
      %p295 = scmp.eq.s32.totalorder %s25, 0
      %p296 = por %p294, %p295
      %p297 = scmp.ne.s32.totalorder %s283, %s284
      %p298 = scmp.eq.s32.totalorder %s26, 1
      %p299 = por %p297, %p298
      %p301 = scmp.ne.s32.totalorder %s284, %s300
      %p302 = scmp.eq.s32.totalorder %s26, 0
      %p303 = por %p301, %p302
      %p304 = scmp.le.s32.totalorder 1, %s20
      %p305 = scmp.lt.s32.totalorder %s20, 3
      %p306 = pnand %p304, %p305
      %p307 = pneg %p306
      // Predicated region
      $region9: #{pointcloud_encoder_forward.1} parent=5 // pred_check
        _
      $region10: #{pointcloud_encoder_forward.1} parent=5 // pred_check_branch
        %309 = sbr.rel (%p306) target = $region12
      $region11: #{pointcloud_encoder_forward.1} parent=5 // pred_region
        %s310 = ssub.s32 %s20, 1
        // Predicated region
        $region13: #{pointcloud_encoder_forward.1} parent=11 // pred_check
          %p311 = pneg %p81
        $region14: #{pointcloud_encoder_forward.1} parent=11 // pred_check_branch
          %313 = sbr.rel (%p311) target = $region16
        $region15: #{pointcloud_encoder_forward.1} parent=11 // pred_region
          _
        $region16: #{pointcloud_encoder_forward.1} parent=11 // pred_fallthru
          _
        // Predicated region
        $region17: #{pointcloud_encoder_forward.1} parent=11 // pred_check
          %p314 = pneg %p102
        $region18: #{pointcloud_encoder_forward.1} parent=11 // pred_check_branch
          %316 = sbr.rel (%p314) target = $region20
        $region19: #{pointcloud_encoder_forward.1} parent=11 // pred_region
          _
        $region20: #{pointcloud_encoder_forward.1} parent=11 // pred_fallthru
          _
        // Predicated region
        $region21: #{pointcloud_encoder_forward.1} parent=11 // pred_check
          %p317 = pneg %p123
        $region22: #{pointcloud_encoder_forward.1} parent=11 // pred_check_branch
          %319 = sbr.rel (%p317) target = $region24
        $region23: #{pointcloud_encoder_forward.1} parent=11 // pred_region
          _
        $region24: #{pointcloud_encoder_forward.1} parent=11 // pred_fallthru
          _
        // Predicated region
        $region25: #{pointcloud_encoder_forward.1} parent=11 // pred_check
          %p320 = pneg %p144
        $region26: #{pointcloud_encoder_forward.1} parent=11 // pred_check_branch
          %322 = sbr.rel (%p320) target = $region28
        $region27: #{pointcloud_encoder_forward.1} parent=11 // pred_region
          _
        $region28: #{pointcloud_encoder_forward.1} parent=11 // pred_fallthru
          _
        // Predicated region
        $region29: #{pointcloud_encoder_forward.1} parent=11 // pred_check
          %p323 = pneg %p165
        $region30: #{pointcloud_encoder_forward.1} parent=11 // pred_check_branch
          %325 = sbr.rel (%p323) target = $region32
        $region31: #{pointcloud_encoder_forward.1} parent=11 // pred_region
          _
        $region32: #{pointcloud_encoder_forward.1} parent=11 // pred_fallthru
          _
        // Predicated region
        $region33: #{pointcloud_encoder_forward.1} parent=11 // pred_check
          %p326 = pneg %p186
        $region34: #{pointcloud_encoder_forward.1} parent=11 // pred_check_branch
          %328 = sbr.rel (%p326) target = $region36
        $region35: #{pointcloud_encoder_forward.1} parent=11 // pred_region
          _
        $region36: #{pointcloud_encoder_forward.1} parent=11 // pred_fallthru
          _
        // Predicated region
        $region37: #{pointcloud_encoder_forward.1} parent=11 // pred_check
          %p329 = pneg %p207
        $region38: #{pointcloud_encoder_forward.1} parent=11 // pred_check_branch
          %331 = sbr.rel (%p329) target = $region40
        $region39: #{pointcloud_encoder_forward.1} parent=11 // pred_region
          _
        $region40: #{pointcloud_encoder_forward.1} parent=11 // pred_fallthru
          _
        // Predicated region
        $region41: #{pointcloud_encoder_forward.1} parent=11 // pred_check
          %p332 = pneg %p228
        $region42: #{pointcloud_encoder_forward.1} parent=11 // pred_check_branch
          %334 = sbr.rel (%p332) target = $region44
        $region43: #{pointcloud_encoder_forward.1} parent=11 // pred_region
          _
        $region44: #{pointcloud_encoder_forward.1} parent=11 // pred_fallthru
          _
        // Predicated region
        $region45: #{pointcloud_encoder_forward.1} parent=11 // pred_check
          %p335 = pneg %p249
        $region46: #{pointcloud_encoder_forward.1} parent=11 // pred_check_branch
          %337 = sbr.rel (%p335) target = $region48
        $region47: #{pointcloud_encoder_forward.1} parent=11 // pred_region
          _
        $region48: #{pointcloud_encoder_forward.1} parent=11 // pred_fallthru
          _
        // Predicated region
        $region49: #{pointcloud_encoder_forward.1} parent=11 // pred_check
          %p338 = pneg %p270
        $region50: #{pointcloud_encoder_forward.1} parent=11 // pred_check_branch
          %340 = sbr.rel (%p338) target = $region52
        $region51: #{pointcloud_encoder_forward.1} parent=11 // pred_region
          _
        $region52: #{pointcloud_encoder_forward.1} parent=11 // pred_fallthru
          _
      $region12: #{pointcloud_encoder_forward.1} parent=5 // pred_fallthru
        _
      %p341 = scmp.lt.s32.totalorder %s20, 2
      // Predicated region
      $region53: #{pointcloud_encoder_forward.1} parent=5 // pred_check
        %p342 = pneg %p341
      $region54: #{pointcloud_encoder_forward.1} parent=5 // pred_check_branch
        %344 = sbr.rel (%p342) target = $region56
      $region55: #{pointcloud_encoder_forward.1} parent=5 // pred_region
        // Predicated region
        $region57: #{pointcloud_encoder_forward.1} parent=55 // pred_check
          %p345 = pneg %p54
        $region58: #{pointcloud_encoder_forward.1} parent=55 // pred_check_branch
          %347 = sbr.rel (%p345) target = $region60
        $region59: #{pointcloud_encoder_forward.1} parent=55 // pred_region
          %p348 = scmp.lt.s32.totalorder %s27, 1
          %s349 = scalar_select %p348, %s27, 1
          %p350 = scmp.lt.s32.totalorder %s28, 0
          %s351 = scalar_select %p350, %s28, 0
          %s352 = sadd.s32 %s351, %s349
          %s353 = smul.addr %s352, 4
          %s354 = scalar_lea.vmem %s0, %s353
        $region60: #{pointcloud_encoder_forward.1} parent=55 // pred_fallthru
          _
      $region56: #{pointcloud_encoder_forward.1} parent=5 // pred_fallthru
        _
      %p355 = scmp.le.s32.totalorder 1, %s20
      %p356 = scmp.lt.s32.totalorder %s20, 3
      %p357 = pnand %p355, %p356
      %p358 = pneg %p357
      // Predicated region
      $region61: #{pointcloud_encoder_forward.1} parent=5 // pred_check
        _
      $region62: #{pointcloud_encoder_forward.1} parent=5 // pred_check_branch
        %360 = sbr.rel (%p357) target = $region64
      $region63: #{pointcloud_encoder_forward.1} parent=5 // pred_region
        %s361 = ssub.s32 %s20, 1
        %p362 = scmp.lt.s32.totalorder %s29, 1
        %s363 = scalar_select %p362, %s29, 1
        %p364 = scmp.lt.s32.totalorder %s30, 0
        %s365 = scalar_select %p364, %s30, 0
        %s366 = sadd.s32 %s365, %s363
        %s367 = smul.addr %s366, 4
        %s368 = scalar_lea.vmem %s0, %s367
        %p369 = pneg %p60
        %p370 = pneg %p57
        %p371 = pneg %p81
        %p372 = pneg %p78
        %p373 = pneg %p102
        %p374 = pneg %p99
        %p375 = pneg %p123
        %p376 = pneg %p120
        %p377 = pneg %p144
        %p378 = pneg %p141
        %p379 = pneg %p165
        %p380 = pneg %p162
        %p381 = pneg %p186
        %p382 = pneg %p183
        %p383 = pneg %p207
        %p384 = pneg %p204
        %p385 = pneg %p228
        %p386 = pneg %p225
        %p387 = pneg %p249
        %p388 = pneg %p246
        %p389 = pneg %p270
        %p390 = pneg %p267
        %p391 = pneg %p296
        %p392 = pneg %p293
        %s393 = sand.u32 %s283, 1
        %s394 = scalar_lea.sflag [#allocation4], %s393
        %s395 = sand.u32 %s283, 1
        %s396 = scalar_lea.vmem [#allocation3], %s395
        %p397 = scmp.lt.s32.totalorder %s29, 1
        %s398 = scalar_select %p397, %s29, 1
        %p399 = scmp.lt.s32.totalorder %s30, 0
        %s400 = scalar_select %p399, %s30, 0
        %s401 = sadd.s32 %s400, %s398
        %s402 = smul.addr %s401, 4
        %s403 = scalar_lea.vmem %s0, %s402
        %p404 = scmp.eq.s32.totalorder %s30, 0
        // Predicated region
        $region65: #{pointcloud_encoder_forward.1} parent=63 // pred_check
          %p405 = pneg %p404
        $region66: #{pointcloud_encoder_forward.1} parent=63 // pred_check_branch
          %407 = sbr.rel (%p405) target = $region68
        $region67: #{pointcloud_encoder_forward.1} parent=63 // pred_region
          %vm408 = vcmask 7168
          %409 = vst.msk [vmem:[#allocation2] sm:$0xff] %vm408, -inf
          %410 = vst.msk [vmem:[#allocation2 + $0x8] sm:$0xff] %vm408, -inf
          %411 = vst.msk [vmem:[#allocation2 + $0x10] sm:$0xff] %vm408, -inf
          %412 = vst.msk [vmem:[#allocation2 + $0x18] sm:$0xff] %vm408, -inf
        $region68: #{pointcloud_encoder_forward.1} parent=63 // pred_fallthru
          _
        %v413 = vld [vmem:[%s403] sm:$0x7]
        %v414 = vld [vmem:[%s1] sm:$0xff]
        %v415 = vld [vmem:[%s1 + $0x8] sm:$0xff]
        %v416 = vld [vmem:[%s1 + $0x10] sm:$0xff]
        %v417 = vld [vmem:[%s1 + $0x18] sm:$0xff]
        %419 = vset.pattern.permute.xlu0 0
        %420 = vperm.xlu0 %419, %v414
        %v421 = vpop.permute.xlu0 %420
        %424 = vset.pattern.permute.xlu0 0
        %425 = vperm.xlu0 %424, %v415
        %v426 = vpop.permute.xlu0 %425
        %429 = vset.pattern.permute.xlu0 0
        %430 = vperm.xlu0 %429, %v416
        %v431 = vpop.permute.xlu0 %430
        %434 = vset.pattern.permute.xlu0 0
        %435 = vperm.xlu0 %434, %v417
        %v436 = vpop.permute.xlu0 %435
        %v438 = vlaneseq
        %v439 = vshrl.u32 %v438, 7
        %v440 = vsub.s32 0, %v439
        %v441 = vrot.slane %v413, %v440
        %v442 = vmul.f32 %v421, %v441
        %v443 = vmul.f32 %v426, %v441
        %v444 = vmul.f32 %v431, %v441
        %v445 = vmul.f32 %v436, %v441
        %446 = vset.pattern.permute.xlu0 1
        %447 = vperm.xlu0 %446, %v414
        %v448 = vpop.permute.xlu0 %447
        %450 = vset.pattern.permute.xlu0 1
        %451 = vperm.xlu0 %450, %v415
        %v452 = vpop.permute.xlu0 %451
        %454 = vset.pattern.permute.xlu0 1
        %455 = vperm.xlu0 %454, %v416
        %v456 = vpop.permute.xlu0 %455
        %458 = vset.pattern.permute.xlu0 1
        %459 = vperm.xlu0 %458, %v417
        %v460 = vpop.permute.xlu0 %459
        %v462 = vlaneseq
        %v463 = vshrl.u32 %v462, 7
        %v464 = vsub.s32 1, %v463
        %v465 = vrot.slane %v413, %v464
        %v466 = vmul.f32 %v448, %v465
        %v467 = vmul.f32 %v452, %v465
        %v468 = vmul.f32 %v456, %v465
        %v469 = vmul.f32 %v460, %v465
        %v470 = vadd.f32 %v442, %v466
        %v471 = vadd.f32 %v443, %v467
        %v472 = vadd.f32 %v444, %v468
        %v473 = vadd.f32 %v445, %v469
        %474 = vset.pattern.permute.xlu0 2
        %475 = vperm.xlu0 %474, %v414
        %v476 = vpop.permute.xlu0 %475
        %478 = vset.pattern.permute.xlu0 2
        %479 = vperm.xlu0 %478, %v415
        %v480 = vpop.permute.xlu0 %479
        %482 = vset.pattern.permute.xlu0 2
        %483 = vperm.xlu0 %482, %v416
        %v484 = vpop.permute.xlu0 %483
        %486 = vset.pattern.permute.xlu0 2
        %487 = vperm.xlu0 %486, %v417
        %v488 = vpop.permute.xlu0 %487
        %v490 = vlaneseq
        %v491 = vshrl.u32 %v490, 7
        %v492 = vsub.s32 2, %v491
        %v493 = vrot.slane %v413, %v492
        %v494 = vmul.f32 %v476, %v493
        %v495 = vmul.f32 %v480, %v493
        %v496 = vmul.f32 %v484, %v493
        %v497 = vmul.f32 %v488, %v493
        %v498 = vadd.f32 %v470, %v494
        %v499 = vadd.f32 %v471, %v495
        %v500 = vadd.f32 %v472, %v496
        %v501 = vadd.f32 %v473, %v497
        %v502 = vld [vmem:[%s2] sm:$0xff]
        %v503 = vld [vmem:[%s2 + $0x8] sm:$0xff]
        %v504 = vld [vmem:[%s2 + $0x10] sm:$0xff]
        %v505 = vld [vmem:[%s2 + $0x18] sm:$0xff]
        %507 = vset.pattern.permute.xlu0 0
        %508 = vperm.xlu0 %507, %v502
        %v509 = vpop.permute.xlu0 %508
        %512 = vset.pattern.permute.xlu0 0
        %513 = vperm.xlu0 %512, %v503
        %v514 = vpop.permute.xlu0 %513
        %517 = vset.pattern.permute.xlu0 0
        %518 = vperm.xlu0 %517, %v504
        %v519 = vpop.permute.xlu0 %518
        %522 = vset.pattern.permute.xlu0 0
        %523 = vperm.xlu0 %522, %v505
        %v524 = vpop.permute.xlu0 %523
        %v526 = vadd.f32 %v498, %v509
        %v527 = vadd.f32 %v499, %v514
        %v528 = vadd.f32 %v500, %v519
        %v529 = vadd.f32 %v501, %v524
        %v530 = vmax.f32 %v526, 0.0
        %v531 = vmax.f32 %v527, 0.0
        %v532 = vmax.f32 %v528, 0.0
        %v533 = vmax.f32 %v529, 0.0
        %v534 = vld [vmem:[%s3] sm:$0xff]
        %v535 = vld [vmem:[%s3 + $0x8] sm:$0xff]
        %v536 = vld [vmem:[%s3 + $0x10] sm:$0xff]
        %v537 = vld [vmem:[%s3 + $0x18] sm:$0xff]
        %v538 = vld [vmem:[%s4] sm:$0xff]
        %v539 = vld [vmem:[%s4 + $0x8] sm:$0xff]
        %v540 = vld [vmem:[%s4 + $0x10] sm:$0xff]
        %v541 = vld [vmem:[%s4 + $0x18] sm:$0xff]
        %543 = vset.pattern.permute.xlu0 0
        %544 = vperm.xlu0 %543, %v538
        %v545 = vpop.permute.xlu0 %544
        %548 = vset.pattern.permute.xlu0 0
        %549 = vperm.xlu0 %548, %v539
        %v550 = vpop.permute.xlu0 %549
        %553 = vset.pattern.permute.xlu0 0
        %554 = vperm.xlu0 %553, %v540
        %v555 = vpop.permute.xlu0 %554
        %558 = vset.pattern.permute.xlu0 0
        %559 = vperm.xlu0 %558, %v541
        %v560 = vpop.permute.xlu0 %559
        %vm562 = vcmask 261120
        %v564 = vsel %vm562, %v534, 0
        %v567 = vsel %vm562, %v535, 0
        %v570 = vsel %vm562, %v536, 0
        %v573 = vsel %vm562, %v537, 0
        %575 = vmatprep.subr.mxu0 0.0
        %576 = vmatpush1.msra.mxu0 0.0
        %577 = vmatprep.subr.mxu0 0.0
        %578 = vmatpush1.msra.mxu0 0.0
        %579 = vmatprep.subr.mxu0 0.0
        %580 = vmatpush1.msra.mxu0 0.0
        %581 = vmatprep.subr.mxu0 0.0
        %582 = vmatpush1.msra.mxu0 0.0
        %583 = vmatprep.subr.mxu0 0.0
        %584 = vmatpush1.msra.mxu0 0.0
        %585 = vmatprep.subr.mxu0 0.0
        %586 = vmatpush1.msra.mxu0 0.0
        %587 = vmatprep.subr.mxu0 0.0
        %588 = vmatpush1.msra.mxu0 0.0
        %589 = vmatprep.subr.mxu0 0.0
        %590 = vmatpush1.msra.mxu0 0.0
        %591 = vmatprep.subr.mxu0 0.0
        %592 = vmatpush1.msra.mxu0 0.0
        %593 = vmatprep.subr.mxu0 0.0
        %594 = vmatpush1.msra.mxu0 0.0
        %595 = vmatprep.subr.mxu0 0.0
        %596 = vmatpush1.msra.mxu0 0.0
        %597 = vmatprep.subr.mxu0 0.0
        %598 = vmatpush1.msra.mxu0 0.0
        %599 = vmatprep.subr.mxu0 0.0
        %600 = vmatpush1.msra.mxu0 %v533
        %601 = vmatprep.subr.mxu0 0.0
        %602 = vmatpush1.msra.mxu0 %v532
        %603 = vmatprep.subr.mxu0 0.0
        %604 = vmatpush1.msra.mxu0 %v531
        %605 = vmatprep.subr.mxu0 0.0
        %606 = vmatpush1.msra.mxu0 %v530
        %607 = vmatprep.subr.mxu0 0.0
        %608 = vmatpush2.msra.mxu0 0.0
        %609 = vmatprep.subr.mxu0 0.0
        %610 = vmatpush2.msra.mxu0 0.0
        %611 = vmatprep.subr.mxu0 0.0
        %612 = vmatpush2.msra.mxu0 0.0
        %613 = vmatprep.subr.mxu0 0.0
        %614 = vmatpush2.msra.mxu0 0.0
        %615 = vmatprep.subr.mxu0 0.0
        %616 = vmatpush2.msra.mxu0 0.0
        %617 = vmatprep.subr.mxu0 0.0
        %618 = vmatpush2.msra.mxu0 0.0
        %619 = vmatprep.subr.mxu0 0.0
        %620 = vmatpush2.msra.mxu0 0.0
        %621 = vmatprep.subr.mxu0 0.0
        %622 = vmatpush2.msra.mxu0 0.0
        %623 = vmatprep.subr.mxu0 0.0
        %624 = vmatpush2.msra.mxu0 0.0
        %625 = vmatprep.subr.mxu0 0.0
        %626 = vmatpush2.msra.mxu0 0.0
        %627 = vmatprep.subr.mxu0 0.0
        %628 = vmatpush2.msra.mxu0 0.0
        %629 = vmatprep.subr.mxu0 0.0
        %630 = vmatpush2.msra.mxu0 0.0
        %631 = vmatprep.subr.mxu0 0.0
        %632 = vmatpush2.msra.mxu0 0.0
        %633 = vmatprep.subr.mxu0 0.0
        %634 = vmatpush2.msra.mxu0 0.0
        %635 = vmatprep.subr.mxu0 0.0
        %636 = vmatpush2.msra.mxu0 0.0
        %637 = vmatprep.subr.mxu0 0.0
        %638 = vmatpush2.msra.mxu0 0.0
        %639 = vmatprep.mubr.f32.mxu0 0.0
        %640 = vmatmul.mubr.f32.gmra.mxu0 %v564
        %v641 = vpop.f32.mrf.mxu0
        %v642 = vadd.f32 %v545, %v641
        %v643 = vpop.f32.mrf.mxu0
        %644 = vmatprep.mubr.f32.mxu0 0.0
        %645 = vmatmul.mubr.f32.gmra.mxu0 %v567
        %v646 = vpop.f32.mrf.mxu0
        %v647 = vadd.f32 %v550, %v646
        %v648 = vpop.f32.mrf.mxu0
        %649 = vmatprep.mubr.f32.mxu0 0.0
        %650 = vmatmul.mubr.f32.gmra.mxu0 %v570
        %v651 = vpop.f32.mrf.mxu0
        %v652 = vadd.f32 %v555, %v651
        %v653 = vpop.f32.mrf.mxu0
        %654 = vmatprep.mubr.f32.mxu0 0.0
        %655 = vmatmul.mubr.f32.gmra.mxu0 %v573
        %v656 = vpop.f32.mrf.mxu0
        %v657 = vadd.f32 %v560, %v656
        %v658 = vpop.f32.mrf.mxu0
        %659 = vdwg.mxu0
        %v660 = vmax.f32 %v642, 0.0
        %v661 = vmax.f32 %v647, 0.0
        %v662 = vmax.f32 %v652, 0.0
        %v663 = vmax.f32 %v657, 0.0
        %v664 = vld [vmem:[%s5] sm:$0xff]
        %v665 = vld [vmem:[%s5 + $0x8] sm:$0xff]
        %v666 = vld [vmem:[%s5 + $0x10] sm:$0xff]
        %v667 = vld [vmem:[%s5 + $0x18] sm:$0xff]
        %v668 = vld [vmem:[%s6] sm:$0xff]
        %v669 = vld [vmem:[%s6 + $0x8] sm:$0xff]
        %v670 = vld [vmem:[%s6 + $0x10] sm:$0xff]
        %v671 = vld [vmem:[%s6 + $0x18] sm:$0xff]
        %673 = vset.pattern.permute.xlu0 0
        %674 = vperm.xlu0 %673, %v668
        %v675 = vpop.permute.xlu0 %674
        %678 = vset.pattern.permute.xlu0 0
        %679 = vperm.xlu0 %678, %v669
        %v680 = vpop.permute.xlu0 %679
        %683 = vset.pattern.permute.xlu0 0
        %684 = vperm.xlu0 %683, %v670
        %v685 = vpop.permute.xlu0 %684
        %688 = vset.pattern.permute.xlu0 0
        %689 = vperm.xlu0 %688, %v671
        %v690 = vpop.permute.xlu0 %689
        %v693 = vsel %vm562, %v664, 0
        %v696 = vsel %vm562, %v665, 0
        %v699 = vsel %vm562, %v666, 0
        %v702 = vsel %vm562, %v667, 0
        %704 = vmatprep.subr.mxu0 0.0
        %705 = vmatpush1.msra.mxu0 0.0
        %706 = vmatprep.subr.mxu0 0.0
        %707 = vmatpush1.msra.mxu0 0.0
        %708 = vmatprep.subr.mxu0 0.0
        %709 = vmatpush1.msra.mxu0 0.0
        %710 = vmatprep.subr.mxu0 0.0
        %711 = vmatpush1.msra.mxu0 0.0
        %712 = vmatprep.subr.mxu0 0.0
        %713 = vmatpush1.msra.mxu0 0.0
        %714 = vmatprep.subr.mxu0 0.0
        %715 = vmatpush1.msra.mxu0 0.0
        %716 = vmatprep.subr.mxu0 0.0
        %717 = vmatpush1.msra.mxu0 0.0
        %718 = vmatprep.subr.mxu0 0.0
        %719 = vmatpush1.msra.mxu0 0.0
        %720 = vmatprep.subr.mxu0 0.0
        %721 = vmatpush1.msra.mxu0 0.0
        %722 = vmatprep.subr.mxu0 0.0
        %723 = vmatpush1.msra.mxu0 0.0
        %724 = vmatprep.subr.mxu0 0.0
        %725 = vmatpush1.msra.mxu0 0.0
        %726 = vmatprep.subr.mxu0 0.0
        %727 = vmatpush1.msra.mxu0 0.0
        %728 = vmatprep.subr.mxu0 0.0
        %729 = vmatpush1.msra.mxu0 %v663
        %730 = vmatprep.subr.mxu0 0.0
        %731 = vmatpush1.msra.mxu0 %v662
        %732 = vmatprep.subr.mxu0 0.0
        %733 = vmatpush1.msra.mxu0 %v661
        %734 = vmatprep.subr.mxu0 0.0
        %735 = vmatpush1.msra.mxu0 %v660
        %736 = vmatprep.subr.mxu0 0.0
        %737 = vmatpush2.msra.mxu0 0.0
        %738 = vmatprep.subr.mxu0 0.0
        %739 = vmatpush2.msra.mxu0 0.0
        %740 = vmatprep.subr.mxu0 0.0
        %741 = vmatpush2.msra.mxu0 0.0
        %742 = vmatprep.subr.mxu0 0.0
        %743 = vmatpush2.msra.mxu0 0.0
        %744 = vmatprep.subr.mxu0 0.0
        %745 = vmatpush2.msra.mxu0 0.0
        %746 = vmatprep.subr.mxu0 0.0
        %747 = vmatpush2.msra.mxu0 0.0
        %748 = vmatprep.subr.mxu0 0.0
        %749 = vmatpush2.msra.mxu0 0.0
        %750 = vmatprep.subr.mxu0 0.0
        %751 = vmatpush2.msra.mxu0 0.0
        %752 = vmatprep.subr.mxu0 0.0
        %753 = vmatpush2.msra.mxu0 0.0
        %754 = vmatprep.subr.mxu0 0.0
        %755 = vmatpush2.msra.mxu0 0.0
        %756 = vmatprep.subr.mxu0 0.0
        %757 = vmatpush2.msra.mxu0 0.0
        %758 = vmatprep.subr.mxu0 0.0
        %759 = vmatpush2.msra.mxu0 0.0
        %760 = vmatprep.subr.mxu0 0.0
        %761 = vmatpush2.msra.mxu0 0.0
        %762 = vmatprep.subr.mxu0 0.0
        %763 = vmatpush2.msra.mxu0 0.0
        %764 = vmatprep.subr.mxu0 0.0
        %765 = vmatpush2.msra.mxu0 0.0
        %766 = vmatprep.subr.mxu0 0.0
        %767 = vmatpush2.msra.mxu0 0.0
        %768 = vmatprep.mubr.f32.mxu0 0.0
        %769 = vmatmul.mubr.f32.gmra.mxu0 %v693
        %v770 = vpop.f32.mrf.mxu0
        %v771 = vadd.f32 %v675, %v770
        %v772 = vpop.f32.mrf.mxu0
        %773 = vmatprep.mubr.f32.mxu0 0.0
        %774 = vmatmul.mubr.f32.gmra.mxu0 %v696
        %v775 = vpop.f32.mrf.mxu0
        %v776 = vadd.f32 %v680, %v775
        %v777 = vpop.f32.mrf.mxu0
        %778 = vmatprep.mubr.f32.mxu0 0.0
        %779 = vmatmul.mubr.f32.gmra.mxu0 %v699
        %v780 = vpop.f32.mrf.mxu0
        %v781 = vadd.f32 %v685, %v780
        %v782 = vpop.f32.mrf.mxu0
        %783 = vmatprep.mubr.f32.mxu0 0.0
        %784 = vmatmul.mubr.f32.gmra.mxu0 %v702
        %v785 = vpop.f32.mrf.mxu0
        %v786 = vadd.f32 %v690, %v785
        %v787 = vpop.f32.mrf.mxu0
        %788 = vdwg.mxu0
        %v789 = vlaneseq
        %v790 = vand.u32 %v789, 127
        %s791 = smul.u32 %s30, 128
        %v792 = vstv %s791
        %v793 = vadd.s32 %v792, %v790
        %vm794 = vcmp.lt.s32.totalorder %v793, 64
        %v795 = vsel %vm794, %v771, -inf
        %v796 = vsel %vm794, %v776, -inf
        %v797 = vsel %vm794, %v781, -inf
        %v798 = vsel %vm794, %v786, -inf
        %v799 = vld [vmem:[#allocation2] sm:$0xff]
        %v800 = vld [vmem:[#allocation2 + $0x8] sm:$0xff]
        %v801 = vld [vmem:[#allocation2 + $0x10] sm:$0xff]
        %v802 = vld [vmem:[#allocation2 + $0x18] sm:$0xff]
        %803 = vmax.xlane.f32.xlu0 %v795
        %v804 = vpop.xlane.xlu0 %803
        %805 = vmax.xlane.f32.xlu0 %v796
        %v806 = vpop.xlane.xlu0 %805
        %807 = vmax.xlane.f32.xlu0 %v797
        %v808 = vpop.xlane.xlu0 %807
        %809 = vmax.xlane.f32.xlu0 %v798
        %v810 = vpop.xlane.xlu0 %809
        %v811 = vmax.f32 %v799, %v804
        %v812 = vmax.f32 %v800, %v806
        %v813 = vmax.f32 %v801, %v808
        %v814 = vmax.f32 %v802, %v810
        %vm815 = vcmask 7168
        %816 = vst.msk [vmem:[#allocation2] sm:$0xff] %vm815, %v811
        %817 = vst.msk [vmem:[#allocation2 + $0x8] sm:$0xff] %vm815, %v812
        %818 = vst.msk [vmem:[#allocation2 + $0x10] sm:$0xff] %vm815, %v813
        %819 = vst.msk [vmem:[#allocation2 + $0x18] sm:$0xff] %vm815, %v814
        // Predicated region
        $region69: #{pointcloud_encoder_forward.1} parent=63 // pred_check
          %p820 = pneg %p404
        $region70: #{pointcloud_encoder_forward.1} parent=63 // pred_check_branch
          %822 = sbr.rel (%p820) target = $region72
        $region71: #{pointcloud_encoder_forward.1} parent=63 // pred_region
          %v823 = vld [vmem:[#allocation2] sm:$0xff]
          %v824 = vld [vmem:[#allocation2 + $0x8] sm:$0xff]
          %v825 = vld [vmem:[#allocation2 + $0x10] sm:$0xff]
          %v826 = vld [vmem:[#allocation2 + $0x18] sm:$0xff]
          %v827 = vld [vmem:[%s7] sm:$0xff]
          %v828 = vld [vmem:[%s7 + $0x8] sm:$0xff]
          %v829 = vld [vmem:[%s7 + $0x10] sm:$0xff]
          %v830 = vld [vmem:[%s7 + $0x18] sm:$0xff]
          %832 = vset.pattern.permute.xlu0 0
          %833 = vperm.xlu0 %832, %v823
          %v834 = vpop.permute.xlu0 %833
          %837 = vset.pattern.permute.xlu0 0
          %838 = vperm.xlu0 %837, %v824
          %v839 = vpop.permute.xlu0 %838
          %842 = vset.pattern.permute.xlu0 0
          %843 = vperm.xlu0 %842, %v825
          %v844 = vpop.permute.xlu0 %843
          %847 = vset.pattern.permute.xlu0 0
          %848 = vperm.xlu0 %847, %v826
          %v849 = vpop.permute.xlu0 %848
          %v851 = vmul.f32 %v827, %v834
          %v852 = vmul.f32 %v828, %v839
          %v853 = vmul.f32 %v829, %v844
          %v854 = vmul.f32 %v830, %v849
          %v855 = vsel %vm562, %v851, 0.0
          %v856 = vsel %vm562, %v852, 0.0
          %v857 = vadd.f32 %v855, %v856
          %v858 = vsel %vm562, %v853, 0.0
          %v859 = vadd.f32 %v857, %v858
          %v860 = vsel %vm562, %v854, 0.0
          %v861 = vadd.f32 %v859, %v860
          %v862 = vrot.slane %v861, 4
          %v863 = vadd.f32 %v861, %v862
          %v864 = vrot.slane %v863, 2
          %v865 = vadd.f32 %v863, %v864
          %v866 = vrot.slane %v865, 1
          %v867 = vadd.f32 %v865, %v866
          %v868 = vld [vmem:[%s8] sm:$0x1]
          %v869 = vadd.f32 %v867, %v868
          %vm870 = vcmask 253952
          %v871 = vsel %vm870, %v869, 0.0
          %872 = vadd.xlane.f32.xlu0 %v871
          %v873 = vpop.xlane.xlu0 %872
          %v874 = vrcp.pop 32.0
          %v875 = vmul.f32 %v873, %v874
          %v876 = vsub.f32 %v869, %v875
          %v877 = vmul.f32 %v876, %v876
          %v878 = vsel %vm870, %v877, 0.0
          %879 = vadd.xlane.f32.xlu0 %v878
          %v880 = vpop.xlane.xlu0 %879
          %v881 = vmul.f32 %v880, %v874
          %v882 = vadd.f32 %v881, 1e-05
          %v883 = vrsqrt.pop %v882
          %v884 = vmul.f32 %v876, %v883
          %v885 = vld [vmem:[%s9] sm:$0x1]
          %v886 = vmul.f32 %v884, %v885
          %v887 = vld [vmem:[%s10] sm:$0x1]
          %v888 = vadd.f32 %v886, %v887
          %v889 = vtanh.pop %v888
          %890 = vst.msk [vmem:[%s396] sm:$0x1] %vm870, %v889
        $region72: #{pointcloud_encoder_forward.1} parent=63 // pred_fallthru
          _
        %s891 = sand.u32 %s283, 1
        %s892 = scalar_lea.sflag [#allocation4], %s891
        %s893 = sand.u32 %s283, 1
        %s894 = scalar_lea.vmem [#allocation3], %s893
        // Predicated region
        $region73: #{pointcloud_encoder_forward.1} parent=63 // pred_check
          %p895 = pneg %p293
        $region74: #{pointcloud_encoder_forward.1} parent=63 // pred_check_branch
          %897 = sbr.rel (%p895) target = $region76
        $region75: #{pointcloud_encoder_forward.1} parent=63 // pred_region
          %s899 = ssub.s32 16, 16
          %900 = vsyncadd %s892, %s899
          %s901 = smul.addr %s29, 16
          %s902 = scalar_lea.hbm %s11, %s901
          %s904 = sshll.u32 %s894, 4
          %s905 = int_to_ptr.vmem [resolvable:$true] %s904
          %907 = dma.vmem_to_hbm [thread:$0]  %s905, 16, %s902, %s892
        $region76: #{pointcloud_encoder_forward.1} parent=63 // pred_fallthru
          _
      $region64: #{pointcloud_encoder_forward.1} parent=5 // pred_fallthru
        _
      %p908 = scmp.le.s32.totalorder 2, %s20
      // Predicated region
      $region77: #{pointcloud_encoder_forward.1} parent=5 // pred_check
        %p909 = pneg %p908
      $region78: #{pointcloud_encoder_forward.1} parent=5 // pred_check_branch
        %911 = sbr.rel (%p909) target = $region80
      $region79: #{pointcloud_encoder_forward.1} parent=5 // pred_region
        %s912 = ssub.s32 %s20, 2
        // Predicated region
        $region81: #{pointcloud_encoder_forward.1} parent=79 // pred_check
          %p913 = pneg %p299
        $region82: #{pointcloud_encoder_forward.1} parent=79 // pred_check_branch
          %915 = sbr.rel (%p913) target = $region84
        $region83: #{pointcloud_encoder_forward.1} parent=79 // pred_region
          %s916 = sand.u32 %s284, 1
          %s917 = scalar_lea.sflag [#allocation4], %s916
          %s918 = sand.u32 %s284, 1
          %s919 = scalar_lea.vmem [#allocation3], %s918
          %920 = dma.done %s917, 16
        $region84: #{pointcloud_encoder_forward.1} parent=79 // pred_fallthru
          _
      $region80: #{pointcloud_encoder_forward.1} parent=5 // pred_fallthru
        _
    $region6: #{pointcloud_encoder_forward.1} parent=1 // loop_footer
      %s24 = sadd.s32 1, %s20
    $region7: #{pointcloud_encoder_forward.1} parent=1 // loop_footer_branch
      %19 = sbr.rel target = $region3
    $region8: #{pointcloud_encoder_forward.1} parent=1 // loop_exit
      _
    %921 = vsyncpa [#allocation4], 1
    %s922 = scalar_lea.sflag [#allocation4], 1
    %923 = vsyncpa %s922, 1

</llo_original>
